<compile_context>
chip_gen: v5e
topology: v5e:2x2
jax: 0.10.0
libtpu: 0.0.40
codegen_flags: <defaults>
</compile_context>

<pallas_src>
import jax
import jax.numpy as jnp
import numpy as np
from jax.experimental import pallas as pl
from jax.experimental.pallas import tpu as pltpu


def blstm_kernel(x_ref, wih_ref, b_ref, whh_ref, wlin_ref, blin_ref, out_ref):
    """Whole LSTM recurrence + linear head in one (gridless) kernel invocation.

    x_ref   : (S, B, 1)  time-major input
    wih_ref : (1, 4H)    input->gates weights
    b_ref   : (1, 4H)    gate bias
    whh_ref : (H, 4H)    recurrent weights, bf16, un-padded contraction (K = H)
    wlin_ref: (H, 128)   linear head weights, zero-padded cols [O, 128)
    blin_ref: (1, 128)   linear head bias,   zero-padded cols [O, 128)
    out_ref : (B, 128)   lane-dense output slab; real result in lanes [0, O)
    """
    S, B, _ = x_ref.shape
    H, G = whh_ref.shape                       # G = 4H = 128

    # Lane mask selecting the g (cell candidate, tanh) quadrant [2H, 3H).
    col = jax.lax.broadcasted_iota(jnp.int32, (B, G), 1)
    g_mask = (col >= 2 * H) & (col < 3 * H)

    # Recurrent weights loaded once; vreg-resident across the unrolled loop.
    whh = whh_ref[...]                         # (H, G) bf16

    # Hoisted (off the serial chain) input projection for ALL steps:
    # gx[t] = x[:, t, None] * W_ih + b   -> (S, B, G)
    gx = x_ref[...] * wih_ref[...][None, :, :] + b_ref[...][None, :, :]

    # h / c carried as dense (B, 4H) vregs; only lanes [0, H) are meaningful.
    # Garbage lanes [H, 4H) of c grow at most O(1) per step (sigmoid-bounded
    # products), so tanh(c) stays finite for small S (S = 8 here).
    h = jnp.zeros((B, G), jnp.float32)
    c = jnp.zeros((B, G), jnp.float32)

    # S is small and static -> fully unrolled time loop inside one grid step.
    for t in range(S):
        # Recurrent projection: single bf16 MXU pass, contraction K = H = 32.
        gates = gx[t] + jnp.dot(h[:, :H].astype(jnp.bfloat16), whh,
                                preferred_element_type=jnp.float32)

        # One EUP pass: sigmoid over the full vreg.  The g quadrant is
        # pre-scaled by 2 and fixed up with 2*s - 1 (== tanh) on the VPU.
        pre = jnp.where(g_mask, gates * 2.0, gates)
        s = jax.nn.sigmoid(pre)
        act = jnp.where(g_mask, 2.0 * s - 1.0, s)     # lanes: [ i | f | g | o ]

        # Align f / g / o quadrants onto the i quadrant via XLU rolls
        # (free slot) instead of lane slices at offsets H / 2H / 3H.
        f_al = pltpu.roll(act, shift=3 * H, axis=1)   # f -> lanes [0, H)
        g_al = pltpu.roll(act, shift=2 * H, axis=1)   # g -> lanes [0, H)
        o_al = pltpu.roll(act, shift=1 * H, axis=1)   # o -> lanes [0, H)

        c = f_al * c + act * g_al                     # f*c + i*g   (lanes [0,H))
        h = o_al * jnp.tanh(c)                        # o*tanh(c)   (lanes [0,H))

    # Fused linear head on the last hidden state; lane-dense unmasked store.
    out_ref[...] = (jnp.dot(h[:, :H], wlin_ref[...],
                            preferred_element_type=jnp.float32)
                    + blin_ref[...])


def _blstm_forward(x, w_ih, w_hh, b, w_lin, b_lin):
    """x: (batch, seq) float32 -> (batch, output_dim) float32."""
    B, S = x.shape
    H, G = w_hh.shape
    O = w_lin.shape[1]
    LANES = 128

    # Time-major input, trailing singleton dim for the in-kernel broadcast.
    x_tm = jnp.transpose(x, (1, 0))[:, :, None].astype(jnp.float32)   # (S, B, 1)

    # bf16 recurrent weights -> single MXU pass per step (f32 accumulate).
    whh_bf16 = w_hh.astype(jnp.bfloat16)                              # (H, 4H)

    # Pad the tiny head to 128 lanes so the kernel output store is unmasked.
    wlin_pad = jnp.zeros((H, LANES), jnp.float32).at[:, :O].set(
        w_lin.astype(jnp.float32))
    blin_pad = jnp.zeros((1, LANES), jnp.float32).at[:, :O].set(
        b_lin.astype(jnp.float32))

    out_pad = pl.pallas_call(
        blstm_kernel,
        out_shape=jax.ShapeDtypeStruct((B, LANES), jnp.float32),
        in_specs=[pl.BlockSpec(memory_space=pltpu.MemorySpace.VMEM)] * 6,
        out_specs=pl.BlockSpec(memory_space=pltpu.MemorySpace.VMEM),
    )(x_tm, w_ih.astype(jnp.float32), b.astype(jnp.float32),
      whh_bf16, wlin_pad, blin_pad)

    return out_pad[:, :O]


# One jitted program: input transpose/padding, the pallas_call and the output
# slice all compile together (no extra dispatches around the kernel).
blstm_forward = jax.jit(_blstm_forward)


def blstm_reference(x, w_ih, w_hh, b, w_lin, b_lin):
    """Pure-JAX f32 reference mirroring the PyTorch forward."""
    B, S = x.shape
    H = w_hh.shape[0]
    x3 = x.reshape(B, S, 1)
    h = jnp.zeros((B, H), jnp.float32)
    c = jnp.zeros((B, H), jnp.float32)
    for t in range(S):
        gates = x3[:, t, :] @ w_ih + h @ w_hh + b
        i = jax.nn.sigmoid(gates[:, 0 * H:1 * H])
        f = jax.nn.sigmoid(gates[:, 1 * H:2 * H])
        g = jnp.tanh(gates[:, 2 * H:3 * H])
        o = jax.nn.sigmoid(gates[:, 3 * H:4 * H])
        c = f * c + i * g
        h = o * jnp.tanh(c)
    return h @ w_lin + b_lin


if __name__ == "__main__":
    # module config: input_dim=1 (implied by the reshape), hidden_size, output_dim
    batch, seq, hidden, out_dim = 8, 8, 32, 4

    key = jax.random.PRNGKey(0)
    kx, k1, k2, k3, k4, k5 = jax.random.split(key, 6)

    x = jax.random.normal(kx, (batch, seq), dtype=jnp.float32)

    scale = 0.1
    w_ih = scale * jax.random.normal(k1, (1, 4 * hidden), dtype=jnp.float32)
    w_hh = scale * jax.random.normal(k2, (hidden, 4 * hidden), dtype=jnp.float32)
    b = scale * jax.random.normal(k3, (1, 4 * hidden), dtype=jnp.float32)
    w_lin = scale * jax.random.normal(k4, (hidden, out_dim), dtype=jnp.float32)
    b_lin = scale * jax.random.normal(k5, (1, out_dim), dtype=jnp.float32)

    out = blstm_forward(x, w_ih, w_hh, b, w_lin, b_lin)
    out = jax.block_until_ready(out)

    ref = blstm_reference(x, w_ih, w_hh, b, w_lin, b_lin)
    # Tolerance loosened vs the pure-f32 version: the recurrent matmul runs in
    # bf16 (f32 accumulate) inside the kernel while the reference stays f32.
    np.testing.assert_allclose(np.asarray(out), np.asarray(ref),
                               rtol=2e-2, atol=2e-2)
    print("KERNEL_OK")
</pallas_src>

<mosaic_0001>
module attributes {stable_mosaic.version = 11 : i64} {
  func.func @blstm_kernel(%arg0: memref<8x8x1xf32, #tpu.memory_space<vmem>>, %arg1: memref<1x128xf32, #tpu.memory_space<vmem>>, %arg2: memref<1x128xf32, #tpu.memory_space<vmem>>, %arg3: memref<32x128xbf16, #tpu.memory_space<vmem>>, %arg4: memref<32x128xf32, #tpu.memory_space<vmem>>, %arg5: memref<1x128xf32, #tpu.memory_space<vmem>>, %arg6: memref<8x128xf32, #tpu.memory_space<vmem>>) attributes {dimension_semantics = [], scalar_prefetch = 0 : i64, scratch_operands = 0 : i64, tpu.core_type = #tpu.core_type<tc>} {
    %0 = tpu.iota {dimensions = array<i32: 1>} : vector<8x128xi32>
    %c64_i32 = arith.constant 64 : i32
    %1 = vector.broadcast %c64_i32 : i32 to vector<8x128xi32>
    %2 = arith.cmpi sge, %0, %1 : vector<8x128xi32>
    %c96_i32 = arith.constant 96 : i32
    %3 = vector.broadcast %c96_i32 : i32 to vector<8x128xi32>
    %4 = arith.cmpi slt, %0, %3 : vector<8x128xi32>
    %5 = arith.andi %2, %4 : vector<8x128xi1>
    %c0 = arith.constant 0 : index
    %c0_0 = arith.constant 0 : index
    %6 = vector.load %arg3[%c0, %c0_0] : memref<32x128xbf16, #tpu.memory_space<vmem>>, vector<32x128xbf16>
    %c0_1 = arith.constant 0 : index
    %c0_2 = arith.constant 0 : index
    %c0_3 = arith.constant 0 : index
    %7 = vector.load %arg0[%c0_1, %c0_2, %c0_3] : memref<8x8x1xf32, #tpu.memory_space<vmem>>, vector<8x8x1xf32>
    %c0_4 = arith.constant 0 : index
    %c0_5 = arith.constant 0 : index
    %8 = vector.load %arg1[%c0_4, %c0_5] : memref<1x128xf32, #tpu.memory_space<vmem>>, vector<1x128xf32>
    %9 = vector.shape_cast %8 : vector<1x128xf32> to vector<1x1x128xf32>
    %10 = vector.broadcast %7 : vector<8x8x1xf32> to vector<8x8x128xf32>
    %11 = vector.broadcast %9 : vector<1x1x128xf32> to vector<8x8x128xf32>
    %12 = arith.mulf %10, %11 : vector<8x8x128xf32>
    %c0_6 = arith.constant 0 : index
    %c0_7 = arith.constant 0 : index
    %13 = vector.load %arg2[%c0_6, %c0_7] : memref<1x128xf32, #tpu.memory_space<vmem>>, vector<1x128xf32>
    %14 = vector.shape_cast %13 : vector<1x128xf32> to vector<1x1x128xf32>
    %15 = vector.broadcast %14 : vector<1x1x128xf32> to vector<8x8x128xf32>
    %16 = arith.addf %12, %15 : vector<8x8x128xf32>
    %cst = arith.constant 0.000000e+00 : f32
    %17 = vector.broadcast %cst : f32 to vector<8x128xf32>
    %cst_8 = arith.constant 0.000000e+00 : f32
    %18 = vector.broadcast %cst_8 : f32 to vector<8x128xf32>
    %19 = vector.extract_strided_slice %16 {offsets = [0, 0, 0], sizes = [1, 8, 128], strides = [1, 1, 1]} : vector<8x8x128xf32> to vector<1x8x128xf32>
    %20 = vector.shape_cast %19 : vector<1x8x128xf32> to vector<8x128xf32>
    %21 = vector.extract_strided_slice %17 {offsets = [0, 0], sizes = [8, 32], strides = [1, 1]} : vector<8x128xf32> to vector<8x32xf32>
    %22 = arith.truncf %21 : vector<8x32xf32> to vector<8x32xbf16>
    %cst_9 = arith.constant dense<0.000000e+00> : vector<8x128xf32>
    %23 = tpu.matmul %22, %6, %cst_9 {dimension_numbers = #tpu.dot_dimension_numbers<[1], [0], [0], [1], [0, 0, 1, 1], [], []>} : vector<8x32xbf16>, vector<32x128xbf16>, vector<8x128xf32> -> vector<8x128xf32>
    %24 = arith.addf %20, %23 : vector<8x128xf32>
    %cst_10 = arith.constant 2.000000e+00 : f32
    %25 = vector.broadcast %cst_10 : f32 to vector<8x128xf32>
    %26 = arith.mulf %24, %25 : vector<8x128xf32>
    %27 = arith.select %5, %26, %24 : vector<8x128xi1>, vector<8x128xf32>
    %28 = arith.negf %27 : vector<8x128xf32>
    %29 = math.exp %28 : vector<8x128xf32>
    %cst_11 = arith.constant 1.000000e+00 : f32
    %30 = vector.broadcast %cst_11 : f32 to vector<8x128xf32>
    %31 = arith.addf %30, %29 : vector<8x128xf32>
    %32 = arith.divf %30, %31 : vector<8x128xf32>
    %cst_12 = arith.constant 2.000000e+00 : f32
    %33 = vector.broadcast %cst_12 : f32 to vector<8x128xf32>
    %34 = arith.mulf %33, %32 : vector<8x128xf32>
    %cst_13 = arith.constant 1.000000e+00 : f32
    %35 = vector.broadcast %cst_13 : f32 to vector<8x128xf32>
    %36 = arith.subf %34, %35 : vector<8x128xf32>
    %37 = arith.select %5, %36, %32 : vector<8x128xi1>, vector<8x128xf32>
    %c96_i32_14 = arith.constant 96 : i32
    %38 = tpu.dynamic_rotate %37 by %c96_i32_14 dim 1 : vector<8x128xf32>, i32 -> vector<8x128xf32>
    %c64_i32_15 = arith.constant 64 : i32
    %39 = tpu.dynamic_rotate %37 by %c64_i32_15 dim 1 : vector<8x128xf32>, i32 -> vector<8x128xf32>
    %c32_i32 = arith.constant 32 : i32
    %40 = tpu.dynamic_rotate %37 by %c32_i32 dim 1 : vector<8x128xf32>, i32 -> vector<8x128xf32>
    %41 = arith.mulf %38, %18 : vector<8x128xf32>
    %42 = arith.mulf %37, %39 : vector<8x128xf32>
    %43 = arith.addf %41, %42 : vector<8x128xf32>
    %44 = math.tanh %43 : vector<8x128xf32>
    %45 = arith.mulf %40, %44 : vector<8x128xf32>
    %46 = vector.extract_strided_slice %16 {offsets = [1, 0, 0], sizes = [1, 8, 128], strides = [1, 1, 1]} : vector<8x8x128xf32> to vector<1x8x128xf32>
    %47 = vector.shape_cast %46 : vector<1x8x128xf32> to vector<8x128xf32>
    %48 = vector.extract_strided_slice %45 {offsets = [0, 0], sizes = [8, 32], strides = [1, 1]} : vector<8x128xf32> to vector<8x32xf32>
    %49 = arith.truncf %48 : vector<8x32xf32> to vector<8x32xbf16>
    %cst_16 = arith.constant dense<0.000000e+00> : vector<8x128xf32>
    %50 = tpu.matmul %49, %6, %cst_16 {dimension_numbers = #tpu.dot_dimension_numbers<[1], [0], [0], [1], [0, 0, 1, 1], [], []>} : vector<8x32xbf16>, vector<32x128xbf16>, vector<8x128xf32> -> vector<8x128xf32>
    %51 = arith.addf %47, %50 : vector<8x128xf32>
    %cst_17 = arith.constant 2.000000e+00 : f32
    %52 = vector.broadcast %cst_17 : f32 to vector<8x128xf32>
    %53 = arith.mulf %51, %52 : vector<8x128xf32>
    %54 = arith.select %5, %53, %51 : vector<8x128xi1>, vector<8x128xf32>
    %55 = arith.negf %54 : vector<8x128xf32>
    %56 = math.exp %55 : vector<8x128xf32>
    %cst_18 = arith.constant 1.000000e+00 : f32
    %57 = vector.broadcast %cst_18 : f32 to vector<8x128xf32>
    %58 = arith.addf %57, %56 : vector<8x128xf32>
    %59 = arith.divf %57, %58 : vector<8x128xf32>
    %cst_19 = arith.constant 2.000000e+00 : f32
    %60 = vector.broadcast %cst_19 : f32 to vector<8x128xf32>
    %61 = arith.mulf %60, %59 : vector<8x128xf32>
    %cst_20 = arith.constant 1.000000e+00 : f32
    %62 = vector.broadcast %cst_20 : f32 to vector<8x128xf32>
    %63 = arith.subf %61, %62 : vector<8x128xf32>
    %64 = arith.select %5, %63, %59 : vector<8x128xi1>, vector<8x128xf32>
    %c96_i32_21 = arith.constant 96 : i32
    %65 = tpu.dynamic_rotate %64 by %c96_i32_21 dim 1 : vector<8x128xf32>, i32 -> vector<8x128xf32>
    %c64_i32_22 = arith.constant 64 : i32
    %66 = tpu.dynamic_rotate %64 by %c64_i32_22 dim 1 : vector<8x128xf32>, i32 -> vector<8x128xf32>
    %c32_i32_23 = arith.constant 32 : i32
    %67 = tpu.dynamic_rotate %64 by %c32_i32_23 dim 1 : vector<8x128xf32>, i32 -> vector<8x128xf32>
    %68 = arith.mulf %65, %43 : vector<8x128xf32>
    %69 = arith.mulf %64, %66 : vector<8x128xf32>
    %70 = arith.addf %68, %69 : vector<8x128xf32>
    %71 = math.tanh %70 : vector<8x128xf32>
    %72 = arith.mulf %67, %71 : vector<8x128xf32>
    %73 = vector.extract_strided_slice %16 {offsets = [2, 0, 0], sizes = [1, 8, 128], strides = [1, 1, 1]} : vector<8x8x128xf32> to vector<1x8x128xf32>
    %74 = vector.shape_cast %73 : vector<1x8x128xf32> to vector<8x128xf32>
    %75 = vector.extract_strided_slice %72 {offsets = [0, 0], sizes = [8, 32], strides = [1, 1]} : vector<8x128xf32> to vector<8x32xf32>
    %76 = arith.truncf %75 : vector<8x32xf32> to vector<8x32xbf16>
    %cst_24 = arith.constant dense<0.000000e+00> : vector<8x128xf32>
    %77 = tpu.matmul %76, %6, %cst_24 {dimension_numbers = #tpu.dot_dimension_numbers<[1], [0], [0], [1], [0, 0, 1, 1], [], []>} : vector<8x32xbf16>, vector<32x128xbf16>, vector<8x128xf32> -> vector<8x128xf32>
    %78 = arith.addf %74, %77 : vector<8x128xf32>
    %cst_25 = arith.constant 2.000000e+00 : f32
    %79 = vector.broadcast %cst_25 : f32 to vector<8x128xf32>
    %80 = arith.mulf %78, %79 : vector<8x128xf32>
    %81 = arith.select %5, %80, %78 : vector<8x128xi1>, vector<8x128xf32>
    %82 = arith.negf %81 : vector<8x128xf32>
    %83 = math.exp %82 : vector<8x128xf32>
    %cst_26 = arith.constant 1.000000e+00 : f32
    %84 = vector.broadcast %cst_26 : f32 to vector<8x128xf32>
    %85 = arith.addf %84, %83 : vector<8x128xf32>
    %86 = arith.divf %84, %85 : vector<8x128xf32>
    %cst_27 = arith.constant 2.000000e+00 : f32
    %87 = vector.broadcast %cst_27 : f32 to vector<8x128xf32>
    %88 = arith.mulf %87, %86 : vector<8x128xf32>
    %cst_28 = arith.constant 1.000000e+00 : f32
    %89 = vector.broadcast %cst_28 : f32 to vector<8x128xf32>
    %90 = arith.subf %88, %89 : vector<8x128xf32>
    %91 = arith.select %5, %90, %86 : vector<8x128xi1>, vector<8x128xf32>
    %c96_i32_29 = arith.constant 96 : i32
    %92 = tpu.dynamic_rotate %91 by %c96_i32_29 dim 1 : vector<8x128xf32>, i32 -> vector<8x128xf32>
    %c64_i32_30 = arith.constant 64 : i32
    %93 = tpu.dynamic_rotate %91 by %c64_i32_30 dim 1 : vector<8x128xf32>, i32 -> vector<8x128xf32>
    %c32_i32_31 = arith.constant 32 : i32
    %94 = tpu.dynamic_rotate %91 by %c32_i32_31 dim 1 : vector<8x128xf32>, i32 -> vector<8x128xf32>
    %95 = arith.mulf %92, %70 : vector<8x128xf32>
    %96 = arith.mulf %91, %93 : vector<8x128xf32>
    %97 = arith.addf %95, %96 : vector<8x128xf32>
    %98 = math.tanh %97 : vector<8x128xf32>
    %99 = arith.mulf %94, %98 : vector<8x128xf32>
    %100 = vector.extract_strided_slice %16 {offsets = [3, 0, 0], sizes = [1, 8, 128], strides = [1, 1, 1]} : vector<8x8x128xf32> to vector<1x8x128xf32>
    %101 = vector.shape_cast %100 : vector<1x8x128xf32> to vector<8x128xf32>
    %102 = vector.extract_strided_slice %99 {offsets = [0, 0], sizes = [8, 32], strides = [1, 1]} : vector<8x128xf32> to vector<8x32xf32>
    %103 = arith.truncf %102 : vector<8x32xf32> to vector<8x32xbf16>
    %cst_32 = arith.constant dense<0.000000e+00> : vector<8x128xf32>
    %104 = tpu.matmul %103, %6, %cst_32 {dimension_numbers = #tpu.dot_dimension_numbers<[1], [0], [0], [1], [0, 0, 1, 1], [], []>} : vector<8x32xbf16>, vector<32x128xbf16>, vector<8x128xf32> -> vector<8x128xf32>
    %105 = arith.addf %101, %104 : vector<8x128xf32>
    %cst_33 = arith.constant 2.000000e+00 : f32
    %106 = vector.broadcast %cst_33 : f32 to vector<8x128xf32>
    %107 = arith.mulf %105, %106 : vector<8x128xf32>
    %108 = arith.select %5, %107, %105 : vector<8x128xi1>, vector<8x128xf32>
    %109 = arith.negf %108 : vector<8x128xf32>
    %110 = math.exp %109 : vector<8x128xf32>
    %cst_34 = arith.constant 1.000000e+00 : f32
    %111 = vector.broadcast %cst_34 : f32 to vector<8x128xf32>
    %112 = arith.addf %111, %110 : vector<8x128xf32>
    %113 = arith.divf %111, %112 : vector<8x128xf32>
    %cst_35 = arith.constant 2.000000e+00 : f32
    %114 = vector.broadcast %cst_35 : f32 to vector<8x128xf32>
    %115 = arith.mulf %114, %113 : vector<8x128xf32>
    %cst_36 = arith.constant 1.000000e+00 : f32
    %116 = vector.broadcast %cst_36 : f32 to vector<8x128xf32>
    %117 = arith.subf %115, %116 : vector<8x128xf32>
    %118 = arith.select %5, %117, %113 : vector<8x128xi1>, vector<8x128xf32>
    %c96_i32_37 = arith.constant 96 : i32
    %119 = tpu.dynamic_rotate %118 by %c96_i32_37 dim 1 : vector<8x128xf32>, i32 -> vector<8x128xf32>
    %c64_i32_38 = arith.constant 64 : i32
    %120 = tpu.dynamic_rotate %118 by %c64_i32_38 dim 1 : vector<8x128xf32>, i32 -> vector<8x128xf32>
    %c32_i32_39 = arith.constant 32 : i32
    %121 = tpu.dynamic_rotate %118 by %c32_i32_39 dim 1 : vector<8x128xf32>, i32 -> vector<8x128xf32>
    %122 = arith.mulf %119, %97 : vector<8x128xf32>
    %123 = arith.mulf %118, %120 : vector<8x128xf32>
    %124 = arith.addf %122, %123 : vector<8x128xf32>
    %125 = math.tanh %124 : vector<8x128xf32>
    %126 = arith.mulf %121, %125 : vector<8x128xf32>
    %127 = vector.extract_strided_slice %16 {offsets = [4, 0, 0], sizes = [1, 8, 128], strides = [1, 1, 1]} : vector<8x8x128xf32> to vector<1x8x128xf32>
    %128 = vector.shape_cast %127 : vector<1x8x128xf32> to vector<8x128xf32>
    %129 = vector.extract_strided_slice %126 {offsets = [0, 0], sizes = [8, 32], strides = [1, 1]} : vector<8x128xf32> to vector<8x32xf32>
    %130 = arith.truncf %129 : vector<8x32xf32> to vector<8x32xbf16>
    %cst_40 = arith.constant dense<0.000000e+00> : vector<8x128xf32>
    %131 = tpu.matmul %130, %6, %cst_40 {dimension_numbers = #tpu.dot_dimension_numbers<[1], [0], [0], [1], [0, 0, 1, 1], [], []>} : vector<8x32xbf16>, vector<32x128xbf16>, vector<8x128xf32> -> vector<8x128xf32>
    %132 = arith.addf %128, %131 : vector<8x128xf32>
    %cst_41 = arith.constant 2.000000e+00 : f32
    %133 = vector.broadcast %cst_41 : f32 to vector<8x128xf32>
    %134 = arith.mulf %132, %133 : vector<8x128xf32>
    %135 = arith.select %5, %134, %132 : vector<8x128xi1>, vector<8x128xf32>
    %136 = arith.negf %135 : vector<8x128xf32>
    %137 = math.exp %136 : vector<8x128xf32>
    %cst_42 = arith.constant 1.000000e+00 : f32
    %138 = vector.broadcast %cst_42 : f32 to vector<8x128xf32>
    %139 = arith.addf %138, %137 : vector<8x128xf32>
    %140 = arith.divf %138, %139 : vector<8x128xf32>
    %cst_43 = arith.constant 2.000000e+00 : f32
    %141 = vector.broadcast %cst_43 : f32 to vector<8x128xf32>
    %142 = arith.mulf %141, %140 : vector<8x128xf32>
    %cst_44 = arith.constant 1.000000e+00 : f32
    %143 = vector.broadcast %cst_44 : f32 to vector<8x128xf32>
    %144 = arith.subf %142, %143 : vector<8x128xf32>
    %145 = arith.select %5, %144, %140 : vector<8x128xi1>, vector<8x128xf32>
    %c96_i32_45 = arith.constant 96 : i32
    %146 = tpu.dynamic_rotate %145 by %c96_i32_45 dim 1 : vector<8x128xf32>, i32 -> vector<8x128xf32>
    %c64_i32_46 = arith.constant 64 : i32
    %147 = tpu.dynamic_rotate %145 by %c64_i32_46 dim 1 : vector<8x128xf32>, i32 -> vector<8x128xf32>
    %c32_i32_47 = arith.constant 32 : i32
    %148 = tpu.dynamic_rotate %145 by %c32_i32_47 dim 1 : vector<8x128xf32>, i32 -> vector<8x128xf32>
    %149 = arith.mulf %146, %124 : vector<8x128xf32>
    %150 = arith.mulf %145, %147 : vector<8x128xf32>
    %151 = arith.addf %149, %150 : vector<8x128xf32>
    %152 = math.tanh %151 : vector<8x128xf32>
    %153 = arith.mulf %148, %152 : vector<8x128xf32>
    %154 = vector.extract_strided_slice %16 {offsets = [5, 0, 0], sizes = [1, 8, 128], strides = [1, 1, 1]} : vector<8x8x128xf32> to vector<1x8x128xf32>
    %155 = vector.shape_cast %154 : vector<1x8x128xf32> to vector<8x128xf32>
    %156 = vector.extract_strided_slice %153 {offsets = [0, 0], sizes = [8, 32], strides = [1, 1]} : vector<8x128xf32> to vector<8x32xf32>
    %157 = arith.truncf %156 : vector<8x32xf32> to vector<8x32xbf16>
    %cst_48 = arith.constant dense<0.000000e+00> : vector<8x128xf32>
    %158 = tpu.matmul %157, %6, %cst_48 {dimension_numbers = #tpu.dot_dimension_numbers<[1], [0], [0], [1], [0, 0, 1, 1], [], []>} : vector<8x32xbf16>, vector<32x128xbf16>, vector<8x128xf32> -> vector<8x128xf32>
    %159 = arith.addf %155, %158 : vector<8x128xf32>
    %cst_49 = arith.constant 2.000000e+00 : f32
    %160 = vector.broadcast %cst_49 : f32 to vector<8x128xf32>
    %161 = arith.mulf %159, %160 : vector<8x128xf32>
    %162 = arith.select %5, %161, %159 : vector<8x128xi1>, vector<8x128xf32>
    %163 = arith.negf %162 : vector<8x128xf32>
    %164 = math.exp %163 : vector<8x128xf32>
    %cst_50 = arith.constant 1.000000e+00 : f32
    %165 = vector.broadcast %cst_50 : f32 to vector<8x128xf32>
    %166 = arith.addf %165, %164 : vector<8x128xf32>
    %167 = arith.divf %165, %166 : vector<8x128xf32>
    %cst_51 = arith.constant 2.000000e+00 : f32
    %168 = vector.broadcast %cst_51 : f32 to vector<8x128xf32>
    %169 = arith.mulf %168, %167 : vector<8x128xf32>
    %cst_52 = arith.constant 1.000000e+00 : f32
    %170 = vector.broadcast %cst_52 : f32 to vector<8x128xf32>
    %171 = arith.subf %169, %170 : vector<8x128xf32>
    %172 = arith.select %5, %171, %167 : vector<8x128xi1>, vector<8x128xf32>
    %c96_i32_53 = arith.constant 96 : i32
    %173 = tpu.dynamic_rotate %172 by %c96_i32_53 dim 1 : vector<8x128xf32>, i32 -> vector<8x128xf32>
    %c64_i32_54 = arith.constant 64 : i32
    %174 = tpu.dynamic_rotate %172 by %c64_i32_54 dim 1 : vector<8x128xf32>, i32 -> vector<8x128xf32>
    %c32_i32_55 = arith.constant 32 : i32
    %175 = tpu.dynamic_rotate %172 by %c32_i32_55 dim 1 : vector<8x128xf32>, i32 -> vector<8x128xf32>
    %176 = arith.mulf %173, %151 : vector<8x128xf32>
    %177 = arith.mulf %172, %174 : vector<8x128xf32>
    %178 = arith.addf %176, %177 : vector<8x128xf32>
    %179 = math.tanh %178 : vector<8x128xf32>
    %180 = arith.mulf %175, %179 : vector<8x128xf32>
    %181 = vector.extract_strided_slice %16 {offsets = [6, 0, 0], sizes = [1, 8, 128], strides = [1, 1, 1]} : vector<8x8x128xf32> to vector<1x8x128xf32>
    %182 = vector.shape_cast %181 : vector<1x8x128xf32> to vector<8x128xf32>
    %183 = vector.extract_strided_slice %180 {offsets = [0, 0], sizes = [8, 32], strides = [1, 1]} : vector<8x128xf32> to vector<8x32xf32>
    %184 = arith.truncf %183 : vector<8x32xf32> to vector<8x32xbf16>
    %cst_56 = arith.constant dense<0.000000e+00> : vector<8x128xf32>
    %185 = tpu.matmul %184, %6, %cst_56 {dimension_numbers = #tpu.dot_dimension_numbers<[1], [0], [0], [1], [0, 0, 1, 1], [], []>} : vector<8x32xbf16>, vector<32x128xbf16>, vector<8x128xf32> -> vector<8x128xf32>
    %186 = arith.addf %182, %185 : vector<8x128xf32>
    %cst_57 = arith.constant 2.000000e+00 : f32
    %187 = vector.broadcast %cst_57 : f32 to vector<8x128xf32>
    %188 = arith.mulf %186, %187 : vector<8x128xf32>
    %189 = arith.select %5, %188, %186 : vector<8x128xi1>, vector<8x128xf32>
    %190 = arith.negf %189 : vector<8x128xf32>
    %191 = math.exp %190 : vector<8x128xf32>
    %cst_58 = arith.constant 1.000000e+00 : f32
    %192 = vector.broadcast %cst_58 : f32 to vector<8x128xf32>
    %193 = arith.addf %192, %191 : vector<8x128xf32>
    %194 = arith.divf %192, %193 : vector<8x128xf32>
    %cst_59 = arith.constant 2.000000e+00 : f32
    %195 = vector.broadcast %cst_59 : f32 to vector<8x128xf32>
    %196 = arith.mulf %195, %194 : vector<8x128xf32>
    %cst_60 = arith.constant 1.000000e+00 : f32
    %197 = vector.broadcast %cst_60 : f32 to vector<8x128xf32>
    %198 = arith.subf %196, %197 : vector<8x128xf32>
    %199 = arith.select %5, %198, %194 : vector<8x128xi1>, vector<8x128xf32>
    %c96_i32_61 = arith.constant 96 : i32
    %200 = tpu.dynamic_rotate %199 by %c96_i32_61 dim 1 : vector<8x128xf32>, i32 -> vector<8x128xf32>
    %c64_i32_62 = arith.constant 64 : i32
    %201 = tpu.dynamic_rotate %199 by %c64_i32_62 dim 1 : vector<8x128xf32>, i32 -> vector<8x128xf32>
    %c32_i32_63 = arith.constant 32 : i32
    %202 = tpu.dynamic_rotate %199 by %c32_i32_63 dim 1 : vector<8x128xf32>, i32 -> vector<8x128xf32>
    %203 = arith.mulf %200, %178 : vector<8x128xf32>
    %204 = arith.mulf %199, %201 : vector<8x128xf32>
    %205 = arith.addf %203, %204 : vector<8x128xf32>
    %206 = math.tanh %205 : vector<8x128xf32>
    %207 = arith.mulf %202, %206 : vector<8x128xf32>
    %208 = vector.extract_strided_slice %16 {offsets = [7, 0, 0], sizes = [1, 8, 128], strides = [1, 1, 1]} : vector<8x8x128xf32> to vector<1x8x128xf32>
    %209 = vector.shape_cast %208 : vector<1x8x128xf32> to vector<8x128xf32>
    %210 = vector.extract_strided_slice %207 {offsets = [0, 0], sizes = [8, 32], strides = [1, 1]} : vector<8x128xf32> to vector<8x32xf32>
    %211 = arith.truncf %210 : vector<8x32xf32> to vector<8x32xbf16>
    %cst_64 = arith.constant dense<0.000000e+00> : vector<8x128xf32>
    %212 = tpu.matmul %211, %6, %cst_64 {dimension_numbers = #tpu.dot_dimension_numbers<[1], [0], [0], [1], [0, 0, 1, 1], [], []>} : vector<8x32xbf16>, vector<32x128xbf16>, vector<8x128xf32> -> vector<8x128xf32>
    %213 = arith.addf %209, %212 : vector<8x128xf32>
    %cst_65 = arith.constant 2.000000e+00 : f32
    %214 = vector.broadcast %cst_65 : f32 to vector<8x128xf32>
    %215 = arith.mulf %213, %214 : vector<8x128xf32>
    %216 = arith.select %5, %215, %213 : vector<8x128xi1>, vector<8x128xf32>
    %217 = arith.negf %216 : vector<8x128xf32>
    %218 = math.exp %217 : vector<8x128xf32>
    %cst_66 = arith.constant 1.000000e+00 : f32
    %219 = vector.broadcast %cst_66 : f32 to vector<8x128xf32>
    %220 = arith.addf %219, %218 : vector<8x128xf32>
    %221 = arith.divf %219, %220 : vector<8x128xf32>
    %cst_67 = arith.constant 2.000000e+00 : f32
    %222 = vector.broadcast %cst_67 : f32 to vector<8x128xf32>
    %223 = arith.mulf %222, %221 : vector<8x128xf32>
    %cst_68 = arith.constant 1.000000e+00 : f32
    %224 = vector.broadcast %cst_68 : f32 to vector<8x128xf32>
    %225 = arith.subf %223, %224 : vector<8x128xf32>
    %226 = arith.select %5, %225, %221 : vector<8x128xi1>, vector<8x128xf32>
    %c96_i32_69 = arith.constant 96 : i32
    %227 = tpu.dynamic_rotate %226 by %c96_i32_69 dim 1 : vector<8x128xf32>, i32 -> vector<8x128xf32>
    %c64_i32_70 = arith.constant 64 : i32
    %228 = tpu.dynamic_rotate %226 by %c64_i32_70 dim 1 : vector<8x128xf32>, i32 -> vector<8x128xf32>
    %c32_i32_71 = arith.constant 32 : i32
    %229 = tpu.dynamic_rotate %226 by %c32_i32_71 dim 1 : vector<8x128xf32>, i32 -> vector<8x128xf32>
    %230 = arith.mulf %227, %205 : vector<8x128xf32>
    %231 = arith.mulf %226, %228 : vector<8x128xf32>
    %232 = arith.addf %230, %231 : vector<8x128xf32>
    %233 = math.tanh %232 : vector<8x128xf32>
    %234 = arith.mulf %229, %233 : vector<8x128xf32>
    %235 = vector.extract_strided_slice %234 {offsets = [0, 0], sizes = [8, 32], strides = [1, 1]} : vector<8x128xf32> to vector<8x32xf32>
    %c0_72 = arith.constant 0 : index
    %c0_73 = arith.constant 0 : index
    %236 = vector.load %arg4[%c0_72, %c0_73] : memref<32x128xf32, #tpu.memory_space<vmem>>, vector<32x128xf32>
    %cst_74 = arith.constant dense<0.000000e+00> : vector<8x128xf32>
    %237 = tpu.matmul %235, %236, %cst_74 {dimension_numbers = #tpu.dot_dimension_numbers<[1], [0], [0], [1], [0, 0, 1, 1], [], []>} : vector<8x32xf32>, vector<32x128xf32>, vector<8x128xf32> -> vector<8x128xf32>
    %c0_75 = arith.constant 0 : index
    %c0_76 = arith.constant 0 : index
    %238 = vector.load %arg5[%c0_75, %c0_76] : memref<1x128xf32, #tpu.memory_space<vmem>>, vector<1x128xf32>
    %239 = vector.broadcast %238 : vector<1x128xf32> to vector<8x128xf32>
    %240 = arith.addf %237, %239 : vector<8x128xf32>
    %c0_77 = arith.constant 0 : index
    %c0_78 = arith.constant 0 : index
    %241 = vector.load %arg6[%c0_77, %c0_78] : memref<8x128xf32, #tpu.memory_space<vmem>>, vector<8x128xf32>
    tpu.vector_store %arg6[%c0_77, %c0_78], %240 {strides = array<i32>} : memref<8x128xf32, #tpu.memory_space<vmem>>, vector<8x128xf32>,
    return
  }
}

</mosaic_0001>

<llo_original>
// kernel: _blstm_forward.1
$region0: #{_blstm_forward.1}
  #allocation0 [shape = 'u32[]', space=smem, size = 0x4, offset = 0x4, fixed_abs, tag = 'smem constant byte address 0x4 - core index']
  #allocation1 [shape = 'u32[72,128]{1,0:T(1,128)}', space=vmem, size = 0x9000, scoped, tag = 'internal scratch']
  %s0 = inlined_call_operand.vmem [shape: f32[8,8,1], index: 0, kind: input, shape index: {}]
  %s1 = inlined_call_operand.vmem [shape: f32[1,128], index: 1, kind: input, shape index: {}]
  %s2 = inlined_call_operand.vmem [shape: f32[1,128], index: 2, kind: input, shape index: {}]
  %s3 = inlined_call_operand.vmem [shape: bf16[32,128], index: 3, kind: input, shape index: {}]
  %s4 = inlined_call_operand.vmem [shape: f32[32,128], index: 4, kind: input, shape index: {}]
  %s5 = inlined_call_operand.vmem [shape: f32[1,128], index: 5, kind: input, shape index: {}]
  %s6 = inlined_call_operand.vmem [shape: f32[8,128], index: 6, kind: output, shape index: {}]
  %s7 = sld [smem:[#allocation0]]
  $region34: #{_blstm_forward.1} parent=0
    _
  %s9 = ssub.s32 1, %s7
  %s10 = scalar_select 0, %s9, %s7
  // Predicated region
  $region2: #{_blstm_forward.1} parent=0 // pred_check
    _
  $region3: #{_blstm_forward.1} parent=0 // pred_check_branch
    %12 = sbr.rel (0) target = $region5
  $region4: #{_blstm_forward.1} parent=0 // pred_region
    _
  $region5: #{_blstm_forward.1} parent=0 // pred_fallthru
    _
  // Predicated region
  $region6: #{_blstm_forward.1} parent=0 // pred_check
    _
  $region7: #{_blstm_forward.1} parent=0 // pred_check_branch
    %14 = sbr.rel (0) target = $region9
  $region8: #{_blstm_forward.1} parent=0 // pred_region
    _
  $region9: #{_blstm_forward.1} parent=0 // pred_fallthru
    _
  // Predicated region
  $region10: #{_blstm_forward.1} parent=0 // pred_check
    _
  $region11: #{_blstm_forward.1} parent=0 // pred_check_branch
    %16 = sbr.rel (0) target = $region13
  $region12: #{_blstm_forward.1} parent=0 // pred_region
    _
  $region13: #{_blstm_forward.1} parent=0 // pred_fallthru
    _
  // Predicated region
  $region14: #{_blstm_forward.1} parent=0 // pred_check
    _
  $region15: #{_blstm_forward.1} parent=0 // pred_check_branch
    %18 = sbr.rel (0) target = $region17
  $region16: #{_blstm_forward.1} parent=0 // pred_region
    _
  $region17: #{_blstm_forward.1} parent=0 // pred_fallthru
    _
  // Predicated region
  $region18: #{_blstm_forward.1} parent=0 // pred_check
    _
  $region19: #{_blstm_forward.1} parent=0 // pred_check_branch
    %20 = sbr.rel (0) target = $region21
  $region20: #{_blstm_forward.1} parent=0 // pred_region
    _
  $region21: #{_blstm_forward.1} parent=0 // pred_fallthru
    _
  // Predicated region
  $region22: #{_blstm_forward.1} parent=0 // pred_check
    _
  $region23: #{_blstm_forward.1} parent=0 // pred_check_branch
    %22 = sbr.rel (0) target = $region25
  $region24: #{_blstm_forward.1} parent=0 // pred_region
    _
  $region25: #{_blstm_forward.1} parent=0 // pred_fallthru
    _
  %v24 = vlaneseq
  %v25 = vand.u32 %v24, 127
  %vm26 = vcmp.ge.s32.totalorder %v25, 64
  %vm27 = vcmp.lt.s32.totalorder %v25, 96
  %vm28 = vmand %vm26, %vm27
  %v29 = vld [vmem:[%s3] sm:$0xf]
  %v30 = vld [vmem:[%s3 + $0x4] sm:$0xf]
  %v31 = vld [vmem:[%s3 + $0x8] sm:$0xf]
  %v32 = vld [vmem:[%s3 + $0xc] sm:$0xf]
  %v33 = vld [vmem:[%s0] sm:$0xff]
  %v34 = vld [vmem:[%s0 + $0x8] sm:$0xff]
  %v35 = vld [vmem:[%s0 + $0x10] sm:$0xff]
  %v36 = vld [vmem:[%s0 + $0x18] sm:$0xff]
  %v37 = vld [vmem:[%s0 + $0x20] sm:$0xff]
  %v38 = vld [vmem:[%s0 + $0x28] sm:$0xff]
  %v39 = vld [vmem:[%s0 + $0x30] sm:$0xff]
  %v40 = vld [vmem:[%s0 + $0x38] sm:$0xff]
  %v41 = vld [vmem:[%s1] sm:$0x1]
  %43 = vset.pattern.permute.xlu0 0
  %44 = vperm.xlu0 %43, %v33
  %v45 = vpop.permute.xlu0 %44
  %48 = vset.pattern.permute.xlu0 0
  %49 = vperm.xlu0 %48, %v34
  %v50 = vpop.permute.xlu0 %49
  %53 = vset.pattern.permute.xlu0 0
  %54 = vperm.xlu0 %53, %v35
  %v55 = vpop.permute.xlu0 %54
  %58 = vset.pattern.permute.xlu0 0
  %59 = vperm.xlu0 %58, %v36
  %v60 = vpop.permute.xlu0 %59
  %63 = vset.pattern.permute.xlu0 0
  %64 = vperm.xlu0 %63, %v37
  %v65 = vpop.permute.xlu0 %64
  %68 = vset.pattern.permute.xlu0 0
  %69 = vperm.xlu0 %68, %v38
  %v70 = vpop.permute.xlu0 %69
  %73 = vset.pattern.permute.xlu0 0
  %74 = vperm.xlu0 %73, %v39
  %v75 = vpop.permute.xlu0 %74
  %78 = vset.pattern.permute.xlu0 0
  %79 = vperm.xlu0 %78, %v40
  %v80 = vpop.permute.xlu0 %79
  %v83 = vperm.slane %v41, 0
  %v85 = vmul.f32 %v45, %v83
  %v86 = vmul.f32 %v50, %v83
  %v87 = vmul.f32 %v55, %v83
  %v88 = vmul.f32 %v60, %v83
  %v89 = vmul.f32 %v65, %v83
  %v90 = vmul.f32 %v70, %v83
  %v91 = vmul.f32 %v75, %v83
  %v92 = vmul.f32 %v80, %v83
  %v93 = vld [vmem:[%s2] sm:$0x1]
  %v95 = vperm.slane %v93, 0
  %v97 = vadd.f32 %v85, %v95
  %v98 = vadd.f32 %v86, %v95
  %v99 = vadd.f32 %v87, %v95
  %v100 = vadd.f32 %v88, %v95
  %v101 = vadd.f32 %v89, %v95
  %v102 = vadd.f32 %v90, %v95
  %v103 = vadd.f32 %v91, %v95
  %v104 = vadd.f32 %v92, %v95
  %v109 = vunpack.c.l.b16 %v29
  %v110 = vunpack.c.l.b16 %v30
  %v111 = vunpack.c.l.b16 %v31
  %v112 = vunpack.c.l.b16 %v32
  %v113 = vpack.c.b16 %v110, %v109
  %v114 = vpack.c.b16 %v112, %v111
  %vm117 = vcmask 261120
  %v119 = vsel %vm117, 0, 0
  %121 = vmatpush.bf16.msra.mxu0 0
  %122 = vmatpush.bf16.msra.mxu0 0
  %123 = vmatpush.bf16.msra.mxu0 0
  %124 = vmatpush.bf16.msra.mxu0 0
  %125 = vmatpush.bf16.msra.mxu0 0
  %126 = vmatpush.bf16.msra.mxu0 0
  %127 = vmatpush.bf16.msra.mxu0 %v114
  %128 = vmatpush.bf16.msra.mxu0 %v113
  %129 = vmatmul.bf16.gmra.mxu0 %v119
  %v130 = vpop.f32.mrf.mxu0
  %v131 = vadd.f32 0.0, %v130
  %v132 = vpop.f32.mrf.mxu0
  %133 = vdwg.mxu0
  %v134 = vadd.f32 %v97, %v131
  %v135 = vmul.f32 %v134, 2.0
  %v136 = vsel %vm28, %v135, %v134
  %v137 = vxor.u32 %v136, 2147483648
  %v138 = vmul.f32 %v137, 1.442695
  %v139 = vpow.pop %v138
  %v140 = vadd.f32 %v139, 1.0
  %v141 = vrcp.pop %v140
  %v142 = vmul.f32 %v140, %v141
  %v143 = vsub.f32 1.0, %v142
  %v144 = vmul.f32 %v141, %v143
  %v145 = vadd.f32 %v141, %v144
  %vm146 = vweird.f32 %v140
  %vm147 = vweird.f32 %v141
  %vm148 = vmor %vm146, %vm147
  %v149 = vsel %vm148, %v141, %v145
  %v150 = vand.u32 2147483647, %v140
  %vm151 = vcmp.eq.f32.partialorder %v150, 8.507059e+37
  %v152 = vand.u32 %v140, 2147483648
  %v153 = vor.u32 1.1754944e-38, %v152
  %v154 = vsel %vm151, %v153, %v149
  %v155 = vmul.f32 1.0, %v154
  %v156 = vmul.f32 %v155, 2.0
  %v157 = vsub.f32 %v156, 1.0
  %v158 = vsel %vm28, %v157, %v155
  %159 = vrot.lane.b32.xlu0 %v158, 96
  %v160 = vpop.permute.xlu0 %159
  %161 = vrot.lane.b32.xlu0 %v158, 64
  %v162 = vpop.permute.xlu0 %161
  %163 = vrot.lane.b32.xlu0 %v158, 32
  %v164 = vpop.permute.xlu0 %163
  %v165 = vmul.f32 %v160, 0.0
  %v166 = vmul.f32 %v158, %v162
  %v167 = vadd.f32 %v165, %v166
  %v168 = vtanh.pop %v167
  %v169 = vmul.f32 %v164, %v168
  %v170 = vpack.c.bf16 %v169, %v169
  %v172 = vsel %vm117, %v170, 0
  %174 = vmatpush.bf16.msra.mxu0 0
  %175 = vmatpush.bf16.msra.mxu0 0
  %176 = vmatpush.bf16.msra.mxu0 0
  %177 = vmatpush.bf16.msra.mxu0 0
  %178 = vmatpush.bf16.msra.mxu0 0
  %179 = vmatpush.bf16.msra.mxu0 0
  %180 = vmatpush.bf16.msra.mxu0 %v114
  %181 = vmatpush.bf16.msra.mxu0 %v113
  %182 = vmatmul.bf16.gmra.mxu0 %v172
  %v183 = vpop.f32.mrf.mxu0
  %v184 = vadd.f32 0.0, %v183
  %v185 = vpop.f32.mrf.mxu0
  %186 = vdwg.mxu0
  %v187 = vadd.f32 %v98, %v184
  %v188 = vmul.f32 %v187, 2.0
  %v189 = vsel %vm28, %v188, %v187
  %v190 = vxor.u32 %v189, 2147483648
  %v191 = vmul.f32 %v190, 1.442695
  %v192 = vpow.pop %v191
  %v193 = vadd.f32 %v192, 1.0
  %v194 = vrcp.pop %v193
  %v195 = vmul.f32 %v193, %v194
  %v196 = vsub.f32 1.0, %v195
  %v197 = vmul.f32 %v194, %v196
  %v198 = vadd.f32 %v194, %v197
  %vm199 = vweird.f32 %v193
  %vm200 = vweird.f32 %v194
  %vm201 = vmor %vm199, %vm200
  %v202 = vsel %vm201, %v194, %v198
  %v203 = vand.u32 2147483647, %v193
  %vm204 = vcmp.eq.f32.partialorder %v203, 8.507059e+37
  %v205 = vand.u32 %v193, 2147483648
  %v206 = vor.u32 1.1754944e-38, %v205
  %v207 = vsel %vm204, %v206, %v202
  %v208 = vmul.f32 1.0, %v207
  %v209 = vmul.f32 %v208, 2.0
  %v210 = vsub.f32 %v209, 1.0
  %v211 = vsel %vm28, %v210, %v208
  %212 = vrot.lane.b32.xlu0 %v211, 96
  %v213 = vpop.permute.xlu0 %212
  %214 = vrot.lane.b32.xlu0 %v211, 64
  %v215 = vpop.permute.xlu0 %214
  %216 = vrot.lane.b32.xlu0 %v211, 32
  %v217 = vpop.permute.xlu0 %216
  %v218 = vmul.f32 %v213, %v167
  %v219 = vmul.f32 %v211, %v215
  %v220 = vadd.f32 %v218, %v219
  %v221 = vtanh.pop %v220
  %v222 = vmul.f32 %v217, %v221
  %v223 = vpack.c.bf16 %v222, %v222
  %v225 = vsel %vm117, %v223, 0
  %227 = vmatpush.bf16.msra.mxu0 0
  %228 = vmatpush.bf16.msra.mxu0 0
  %229 = vmatpush.bf16.msra.mxu0 0
  %230 = vmatpush.bf16.msra.mxu0 0
  %231 = vmatpush.bf16.msra.mxu0 0
  %232 = vmatpush.bf16.msra.mxu0 0
  %233 = vmatpush.bf16.msra.mxu0 %v114
  %234 = vmatpush.bf16.msra.mxu0 %v113
  %235 = vmatmul.bf16.gmra.mxu0 %v225
  %v236 = vpop.f32.mrf.mxu0
  %v237 = vadd.f32 0.0, %v236
  %v238 = vpop.f32.mrf.mxu0
  %239 = vdwg.mxu0
  %v240 = vadd.f32 %v99, %v237
  %v241 = vmul.f32 %v240, 2.0
  %v242 = vsel %vm28, %v241, %v240
  %v243 = vxor.u32 %v242, 2147483648
  %v244 = vmul.f32 %v243, 1.442695
  %v245 = vpow.pop %v244
  %v246 = vadd.f32 %v245, 1.0
  %v247 = vrcp.pop %v246
  %v248 = vmul.f32 %v246, %v247
  %v249 = vsub.f32 1.0, %v248
  %v250 = vmul.f32 %v247, %v249
  %v251 = vadd.f32 %v247, %v250
  %vm252 = vweird.f32 %v246
  %vm253 = vweird.f32 %v247
  %vm254 = vmor %vm252, %vm253
  %v255 = vsel %vm254, %v247, %v251
  %v256 = vand.u32 2147483647, %v246
  %vm257 = vcmp.eq.f32.partialorder %v256, 8.507059e+37
  %v258 = vand.u32 %v246, 2147483648
  %v259 = vor.u32 1.1754944e-38, %v258
  %v260 = vsel %vm257, %v259, %v255
  %v261 = vmul.f32 1.0, %v260
  %v262 = vmul.f32 %v261, 2.0
  %v263 = vsub.f32 %v262, 1.0
  %v264 = vsel %vm28, %v263, %v261
  %265 = vrot.lane.b32.xlu0 %v264, 96
  %v266 = vpop.permute.xlu0 %265
  %267 = vrot.lane.b32.xlu0 %v264, 64
  %v268 = vpop.permute.xlu0 %267
  %269 = vrot.lane.b32.xlu0 %v264, 32
  %v270 = vpop.permute.xlu0 %269
  %v271 = vmul.f32 %v266, %v220
  %v272 = vmul.f32 %v264, %v268
  %v273 = vadd.f32 %v271, %v272
  %v274 = vtanh.pop %v273
  %v275 = vmul.f32 %v270, %v274
  %v276 = vpack.c.bf16 %v275, %v275
  %v278 = vsel %vm117, %v276, 0
  %280 = vmatpush.bf16.msra.mxu0 0
  %281 = vmatpush.bf16.msra.mxu0 0
  %282 = vmatpush.bf16.msra.mxu0 0
  %283 = vmatpush.bf16.msra.mxu0 0
  %284 = vmatpush.bf16.msra.mxu0 0
  %285 = vmatpush.bf16.msra.mxu0 0
  %286 = vmatpush.bf16.msra.mxu0 %v114
  %287 = vmatpush.bf16.msra.mxu0 %v113
  %288 = vmatmul.bf16.gmra.mxu0 %v278
  %v289 = vpop.f32.mrf.mxu0
  %v290 = vadd.f32 0.0, %v289
  %v291 = vpop.f32.mrf.mxu0
  %292 = vdwg.mxu0
  %v293 = vadd.f32 %v100, %v290
  %v294 = vmul.f32 %v293, 2.0
  %v295 = vsel %vm28, %v294, %v293
  %v296 = vxor.u32 %v295, 2147483648
  %v297 = vmul.f32 %v296, 1.442695
  %v298 = vpow.pop %v297
  %v299 = vadd.f32 %v298, 1.0
  %v300 = vrcp.pop %v299
  %v301 = vmul.f32 %v299, %v300
  %v302 = vsub.f32 1.0, %v301
  %v303 = vmul.f32 %v300, %v302
  %v304 = vadd.f32 %v300, %v303
  %vm305 = vweird.f32 %v299
  %vm306 = vweird.f32 %v300
  %vm307 = vmor %vm305, %vm306
  %v308 = vsel %vm307, %v300, %v304
  %v309 = vand.u32 2147483647, %v299
  %vm310 = vcmp.eq.f32.partialorder %v309, 8.507059e+37
  %v311 = vand.u32 %v299, 2147483648
  %v312 = vor.u32 1.1754944e-38, %v311
  %v313 = vsel %vm310, %v312, %v308
  %v314 = vmul.f32 1.0, %v313
  %v315 = vmul.f32 %v314, 2.0
  %v316 = vsub.f32 %v315, 1.0
  %v317 = vsel %vm28, %v316, %v314
  %318 = vrot.lane.b32.xlu0 %v317, 96
  %v319 = vpop.permute.xlu0 %318
  %320 = vrot.lane.b32.xlu0 %v317, 64
  %v321 = vpop.permute.xlu0 %320
  %322 = vrot.lane.b32.xlu0 %v317, 32
  %v323 = vpop.permute.xlu0 %322
  %v324 = vmul.f32 %v319, %v273
  %v325 = vmul.f32 %v317, %v321
  %v326 = vadd.f32 %v324, %v325
  %v327 = vtanh.pop %v326
  %v328 = vmul.f32 %v323, %v327
  %v329 = vpack.c.bf16 %v328, %v328
  %v331 = vsel %vm117, %v329, 0
  %333 = vmatpush.bf16.msra.mxu0 0
  %334 = vmatpush.bf16.msra.mxu0 0
  %335 = vmatpush.bf16.msra.mxu0 0
  %336 = vmatpush.bf16.msra.mxu0 0
  %337 = vmatpush.bf16.msra.mxu0 0
  %338 = vmatpush.bf16.msra.mxu0 0
  %339 = vmatpush.bf16.msra.mxu0 %v114
  %340 = vmatpush.bf16.msra.mxu0 %v113
  %341 = vmatmul.bf16.gmra.mxu0 %v331
  %v342 = vpop.f32.mrf.mxu0
  %v343 = vadd.f32 0.0, %v342
  %v344 = vpop.f32.mrf.mxu0
  %345 = vdwg.mxu0
  %v346 = vadd.f32 %v101, %v343
  %v347 = vmul.f32 %v346, 2.0
  %v348 = vsel %vm28, %v347, %v346
  %v349 = vxor.u32 %v348, 2147483648
  %v350 = vmul.f32 %v349, 1.442695
  %v351 = vpow.pop %v350
  %v352 = vadd.f32 %v351, 1.0
  %v353 = vrcp.pop %v352
  %v354 = vmul.f32 %v352, %v353
  %v355 = vsub.f32 1.0, %v354
  %v356 = vmul.f32 %v353, %v355
  %v357 = vadd.f32 %v353, %v356
  %vm358 = vweird.f32 %v352
  %vm359 = vweird.f32 %v353
  %vm360 = vmor %vm358, %vm359
  %v361 = vsel %vm360, %v353, %v357
  %v362 = vand.u32 2147483647, %v352
  %vm363 = vcmp.eq.f32.partialorder %v362, 8.507059e+37
  %v364 = vand.u32 %v352, 2147483648
  %v365 = vor.u32 1.1754944e-38, %v364
  %v366 = vsel %vm363, %v365, %v361
  %v367 = vmul.f32 1.0, %v366
  %v368 = vmul.f32 %v367, 2.0
  %v369 = vsub.f32 %v368, 1.0
  %v370 = vsel %vm28, %v369, %v367
  %371 = vrot.lane.b32.xlu0 %v370, 96
  %v372 = vpop.permute.xlu0 %371
  %373 = vrot.lane.b32.xlu0 %v370, 64
  %v374 = vpop.permute.xlu0 %373
  %375 = vrot.lane.b32.xlu0 %v370, 32
  %v376 = vpop.permute.xlu0 %375
  %v377 = vmul.f32 %v372, %v326
  %v378 = vmul.f32 %v370, %v374
  %v379 = vadd.f32 %v377, %v378
  %v380 = vtanh.pop %v379
  %v381 = vmul.f32 %v376, %v380
  %v382 = vpack.c.bf16 %v381, %v381
  %v384 = vsel %vm117, %v382, 0
  %386 = vmatpush.bf16.msra.mxu0 0
  %387 = vmatpush.bf16.msra.mxu0 0
  %388 = vmatpush.bf16.msra.mxu0 0
  %389 = vmatpush.bf16.msra.mxu0 0
  %390 = vmatpush.bf16.msra.mxu0 0
  %391 = vmatpush.bf16.msra.mxu0 0
  %392 = vmatpush.bf16.msra.mxu0 %v114
  %393 = vmatpush.bf16.msra.mxu0 %v113
  %394 = vmatmul.bf16.gmra.mxu0 %v384
  %v395 = vpop.f32.mrf.mxu0
  %v396 = vadd.f32 0.0, %v395
  %v397 = vpop.f32.mrf.mxu0
  %398 = vdwg.mxu0
  %v399 = vadd.f32 %v102, %v396
  %v400 = vmul.f32 %v399, 2.0
  %v401 = vsel %vm28, %v400, %v399
  %v402 = vxor.u32 %v401, 2147483648
  %v403 = vmul.f32 %v402, 1.442695
  %v404 = vpow.pop %v403
  %v405 = vadd.f32 %v404, 1.0
  %v406 = vrcp.pop %v405
  %v407 = vmul.f32 %v405, %v406
  %v408 = vsub.f32 1.0, %v407
  %v409 = vmul.f32 %v406, %v408
  %v410 = vadd.f32 %v406, %v409
  %vm411 = vweird.f32 %v405
  %vm412 = vweird.f32 %v406
  %vm413 = vmor %vm411, %vm412
  %v414 = vsel %vm413, %v406, %v410
  %v415 = vand.u32 2147483647, %v405
  %vm416 = vcmp.eq.f32.partialorder %v415, 8.507059e+37
  %v417 = vand.u32 %v405, 2147483648
  %v418 = vor.u32 1.1754944e-38, %v417
  %v419 = vsel %vm416, %v418, %v414
  %v420 = vmul.f32 1.0, %v419
  %v421 = vmul.f32 %v420, 2.0
  %v422 = vsub.f32 %v421, 1.0
  %v423 = vsel %vm28, %v422, %v420
  %424 = vrot.lane.b32.xlu0 %v423, 96
  %v425 = vpop.permute.xlu0 %424
  %426 = vrot.lane.b32.xlu0 %v423, 64
  %v427 = vpop.permute.xlu0 %426
  %428 = vrot.lane.b32.xlu0 %v423, 32
  %v429 = vpop.permute.xlu0 %428
  %v430 = vmul.f32 %v425, %v379
  %v431 = vmul.f32 %v423, %v427
  %v432 = vadd.f32 %v430, %v431
  %v433 = vtanh.pop %v432
  %v434 = vmul.f32 %v429, %v433
  %v435 = vpack.c.bf16 %v434, %v434
  %v437 = vsel %vm117, %v435, 0
  %439 = vmatpush.bf16.msra.mxu0 0
  %440 = vmatpush.bf16.msra.mxu0 0
  %441 = vmatpush.bf16.msra.mxu0 0
  %442 = vmatpush.bf16.msra.mxu0 0
  %443 = vmatpush.bf16.msra.mxu0 0
  %444 = vmatpush.bf16.msra.mxu0 0
  %445 = vmatpush.bf16.msra.mxu0 %v114
  %446 = vmatpush.bf16.msra.mxu0 %v113
  %447 = vmatmul.bf16.gmra.mxu0 %v437
  %v448 = vpop.f32.mrf.mxu0
  %v449 = vadd.f32 0.0, %v448
  %v450 = vpop.f32.mrf.mxu0
  %451 = vdwg.mxu0
  %v452 = vadd.f32 %v103, %v449
  %v453 = vmul.f32 %v452, 2.0
  %v454 = vsel %vm28, %v453, %v452
  %v455 = vxor.u32 %v454, 2147483648
  %v456 = vmul.f32 %v455, 1.442695
  %v457 = vpow.pop %v456
  %v458 = vadd.f32 %v457, 1.0
  %v459 = vrcp.pop %v458
  %v460 = vmul.f32 %v458, %v459
  %v461 = vsub.f32 1.0, %v460
  %v462 = vmul.f32 %v459, %v461
  %v463 = vadd.f32 %v459, %v462
  %vm464 = vweird.f32 %v458
  %vm465 = vweird.f32 %v459
  %vm466 = vmor %vm464, %vm465
  %v467 = vsel %vm466, %v459, %v463
  %v468 = vand.u32 2147483647, %v458
  %vm469 = vcmp.eq.f32.partialorder %v468, 8.507059e+37
  %v470 = vand.u32 %v458, 2147483648
  %v471 = vor.u32 1.1754944e-38, %v470
  %v472 = vsel %vm469, %v471, %v467
  %v473 = vmul.f32 1.0, %v472
  %v474 = vmul.f32 %v473, 2.0
  %v475 = vsub.f32 %v474, 1.0
  %v476 = vsel %vm28, %v475, %v473
  %477 = vrot.lane.b32.xlu0 %v476, 96
  %v478 = vpop.permute.xlu0 %477
  %479 = vrot.lane.b32.xlu0 %v476, 64
  %v480 = vpop.permute.xlu0 %479
  %481 = vrot.lane.b32.xlu0 %v476, 32
  %v482 = vpop.permute.xlu0 %481
  %v483 = vmul.f32 %v478, %v432
  %v484 = vmul.f32 %v476, %v480
  %v485 = vadd.f32 %v483, %v484
  %v486 = vtanh.pop %v485
  %v487 = vmul.f32 %v482, %v486
  %v488 = vpack.c.bf16 %v487, %v487
  %v490 = vsel %vm117, %v488, 0
  %492 = vmatpush.bf16.msra.mxu0 0
  %493 = vmatpush.bf16.msra.mxu0 0
  %494 = vmatpush.bf16.msra.mxu0 0
  %495 = vmatpush.bf16.msra.mxu0 0
  %496 = vmatpush.bf16.msra.mxu0 0
  %497 = vmatpush.bf16.msra.mxu0 0
  %498 = vmatpush.bf16.msra.mxu0 %v114
  %499 = vmatpush.bf16.msra.mxu0 %v113
  %500 = vmatmul.bf16.gmra.mxu0 %v490
  %v501 = vpop.f32.mrf.mxu0
  %v502 = vadd.f32 0.0, %v501
  %v503 = vpop.f32.mrf.mxu0
  %504 = vdwg.mxu0
  %v505 = vadd.f32 %v104, %v502
  %v506 = vmul.f32 %v505, 2.0
  %v507 = vsel %vm28, %v506, %v505
  %v508 = vxor.u32 %v507, 2147483648
  %v509 = vmul.f32 %v508, 1.442695
  %v510 = vpow.pop %v509
  %v511 = vadd.f32 %v510, 1.0
  %v512 = vrcp.pop %v511
  %v513 = vmul.f32 %v511, %v512
  %v514 = vsub.f32 1.0, %v513
  %v515 = vmul.f32 %v512, %v514
  %v516 = vadd.f32 %v512, %v515
  %vm517 = vweird.f32 %v511
  %vm518 = vweird.f32 %v512
  %vm519 = vmor %vm517, %vm518
  %v520 = vsel %vm519, %v512, %v516
  %v521 = vand.u32 2147483647, %v511
  %vm522 = vcmp.eq.f32.partialorder %v521, 8.507059e+37
  %v523 = vand.u32 %v511, 2147483648
  %v524 = vor.u32 1.1754944e-38, %v523
  %v525 = vsel %vm522, %v524, %v520
  %v526 = vmul.f32 1.0, %v525
  %v527 = vmul.f32 %v526, 2.0
  %v528 = vsub.f32 %v527, 1.0
  %v529 = vsel %vm28, %v528, %v526
  %530 = vrot.lane.b32.xlu0 %v529, 96
  %v531 = vpop.permute.xlu0 %530
  %532 = vrot.lane.b32.xlu0 %v529, 64
  %v533 = vpop.permute.xlu0 %532
  %534 = vrot.lane.b32.xlu0 %v529, 32
  %v535 = vpop.permute.xlu0 %534
  %v536 = vmul.f32 %v531, %v485
  %v537 = vmul.f32 %v529, %v533
  %v538 = vadd.f32 %v536, %v537
  %v539 = vtanh.pop %v538
  %v540 = vmul.f32 %v535, %v539
  %v541 = vld [vmem:[%s4] sm:$0xff]
  %v542 = vld [vmem:[%s4 + $0x8] sm:$0xff]
  %v543 = vld [vmem:[%s4 + $0x10] sm:$0xff]
  %v544 = vld [vmem:[%s4 + $0x18] sm:$0xff]
  %v545 = vld [vmem:[%s5] sm:$0x1]
  %v547 = vperm.slane %v545, 0
  %v550 = vsel %vm117, %v540, 0
  %552 = vmatpush.msra.mxu0 0.0
  %553 = vmatpush.msra.mxu0 0.0
  %554 = vmatpush.msra.mxu0 0.0
  %555 = vmatpush.msra.mxu0 0.0
  %556 = vmatpush.msra.mxu0 0.0
  %557 = vmatpush.msra.mxu0 0.0
  %558 = vmatpush.msra.mxu0 0.0
  %559 = vmatpush.msra.mxu0 0.0
  %560 = vmatpush.msra.mxu0 0.0
  %561 = vmatpush.msra.mxu0 0.0
  %562 = vmatpush.msra.mxu0 0.0
  %563 = vmatpush.msra.mxu0 0.0
  %564 = vmatpush.msra.mxu0 %v544
  %565 = vmatpush.msra.mxu0 %v543
  %566 = vmatpush.msra.mxu0 %v542
  %567 = vmatpush.msra.mxu0 %v541
  %568 = vmatmul.f32.gmra.mxu0 %v550
  %v569 = vpop.f32.mrf.mxu0
  %v570 = vadd.f32 %v547, %v569
  %571 = vdwg.mxu0
  %572 = vst [vmem:[%s6] sm:$0xff] %v570
  // Predicated region
  $region26: #{_blstm_forward.1} parent=0 // pred_check
    _
  $region27: #{_blstm_forward.1} parent=0 // pred_check_branch
    %574 = sbr.rel (0) target = $region29
  $region28: #{_blstm_forward.1} parent=0 // pred_region
    _
  $region29: #{_blstm_forward.1} parent=0 // pred_fallthru
    _
  // Predicated region
  $region30: #{_blstm_forward.1} parent=0 // pred_check
    _
  $region31: #{_blstm_forward.1} parent=0 // pred_check_branch
    %576 = sbr.rel (0) target = $region33
  $region32: #{_blstm_forward.1} parent=0 // pred_region
    _
  $region33: #{_blstm_forward.1} parent=0 // pred_fallthru
    _

</llo_original>
